<compile_context>
chip_gen: v7x
topology: tpu7x:2x2x1
jax: 0.10.0
libtpu: 0.0.40
codegen_flags: <defaults>
</compile_context>

<pallas_src>
import functools
import math

import jax
import jax.numpy as jnp
from jax import lax
from jax.experimental import pallas as pl
from jax.experimental.pallas import tpu as pltpu

_INV_SQRT2 = 1.0 / math.sqrt(2.0)


def _round_up(x: int, m: int) -> int:
    return ((x + m - 1) // m) * m


def _sublane(dtype) -> int:
    # Minimum second-to-last-dim tile: 8 rows for 32-bit, 16 for 16-bit,
    # 32 for 8-bit dtypes.
    return max(8, 256 // (jnp.dtype(dtype).itemsize * 8))


def _message_receiver_kernel(m_ref, w_ref, b_ref, o_ref):
    # MXU matmul with f32 accumulation.  bf16 inputs feed the MXU natively;
    # for f32 inputs request full-precision passes (kernel is HBM-stream
    # bound, the extra MXU passes are hidden under the DMA pipeline).
    prec = (lax.Precision.HIGHEST if m_ref.dtype == jnp.float32
            else lax.Precision.DEFAULT)
    y = jnp.dot(m_ref[...], w_ref[...],
                preferred_element_type=jnp.float32, precision=prec)
    y = y + b_ref[...].astype(jnp.float32)          # (bb, n_pad) + (1, n_pad)
    # Exact GELU (PyTorch nn.GELU() default, approximate='none').
    # TODO(synk): on v7x the erf VALU polynomial becomes the ceiling; a
    # tanh-approx GELU (EUP slot) would ~2x there but changes numerics.
    g = y * 0.5 * (1.0 + lax.erf(y * _INV_SQRT2))
    o_ref[...] = g.astype(o_ref.dtype)


@functools.partial(jax.jit, static_argnames=("block_b",))
def message_receiver(m_t, w_t, bias, *, block_b=None):
    """m_t: (B, n_m); w_t: (n_m, n) (= PyTorch weight.T); bias: (n,).

    Returns gelu(m_t @ w_t + bias) in m_t.dtype (f32 or bf16 supported).
    """
    B, n_m = m_t.shape
    n = w_t.shape[1]
    out_dtype = m_t.dtype

    in_item = jnp.dtype(m_t.dtype).itemsize
    out_item = jnp.dtype(out_dtype).itemsize
    sub = _sublane(m_t.dtype)

    # Lane-pad the output feature dim (weight/bias) so every writeback is an
    # unmasked, lane-dense store; padded columns are sliced off at the end.
    n_pad = _round_up(n, 128)
    if n_pad != n:
        w_t = jnp.pad(w_t, ((0, 0), (0, n_pad - n)))
        bias = jnp.pad(bias, ((0, n_pad - n),))
    bias2d = bias.reshape(1, n_pad)

    # ---- batch tile selection -------------------------------------------
    # Target ~2 MiB of (activation-in + output-out) traffic per grid step so
    # the ~0.35 us fixed step cost is a small fraction on every generation;
    # cap at 4096 rows to keep double-buffered VMEM comfortably inside the
    # scoped limit on v7x (64 MiB physical) as well as v5e/v6e.
    bytes_per_row = n_m * in_item + n_pad * out_item
    if block_b is None:
        bb = (2 * 1024 * 1024) // max(1, bytes_per_row)
        bb = min(4096, max(sub, bb))
    else:
        bb = max(sub, int(block_b))
    bb = _round_up(bb, sub)
    # Never larger than the (sublane-rounded) batch.
    bb = min(bb, _round_up(B, sub))
    # Keep >= 2 grid steps whenever the batch allows it (v7x megacore sharding
    # via "parallel" semantics + DMA/compute overlap).
    if B > sub:
        bb = min(bb, max(sub, _round_up((B + 1) // 2, sub)))

    # No wrapper-side batch padding: Pallas masks the tail block's writeback,
    # which is far cheaper than re-copying all of m_t through HBM.
    grid = (pl.cdiv(B, bb),)

    cost = pl.CostEstimate(
        flops=2 * B * n_m * n_pad,
        transcendentals=B * n_pad,
        bytes_accessed=(B * n_m * in_item
                        + n_m * n_pad * jnp.dtype(w_t.dtype).itemsize
                        + n_pad * jnp.dtype(bias.dtype).itemsize
                        + B * n_pad * out_item),
    )

    out = pl.pallas_call(
        _message_receiver_kernel,
        out_shape=jax.ShapeDtypeStruct((B, n_pad), out_dtype),
        grid_spec=pltpu.PrefetchScalarGridSpec(
            num_scalar_prefetch=0,
            grid=grid,
            in_specs=[
                pl.BlockSpec((bb, n_m), lambda i: (i, 0)),
                # Constant block index -> weight/bias fetched once, resident.
                pl.BlockSpec((n_m, n_pad), lambda i: (0, 0)),
                pl.BlockSpec((1, n_pad), lambda i: (0, 0)),
            ],
            out_specs=pl.BlockSpec((bb, n_pad), lambda i: (i, 0)),
        ),
        compiler_params=pltpu.CompilerParams(
            dimension_semantics=("parallel",),
        ),
        cost_estimate=cost,
    )(m_t, w_t, bias2d)

    return out if n_pad == n else out[:, :n]


def _reference(m_t, w_t, bias):
    y = jnp.dot(m_t.astype(jnp.float32), w_t.astype(jnp.float32),
                precision=lax.Precision.HIGHEST) + bias.astype(jnp.float32)
    return jax.nn.gelu(y, approximate=False)


if __name__ == "__main__":
    # Module config: n_m (message dim) -> n (output dim)
    n_m, n = 32, 128
    batch = 40  # deliberately NOT a tile multiple -> exercises tail masking

    key = jax.random.PRNGKey(0)
    k_m, k_w, k_b = jax.random.split(key, 3)

    # nn.Linear(n_m, n): weight (n, n_m), bias (n,)
    bound = 1.0 / math.sqrt(n_m)
    weight = jax.random.uniform(k_w, (n, n_m), jnp.float32, -bound, bound)
    bias = jax.random.uniform(k_b, (n,), jnp.float32, -bound, bound)
    m_t = jax.random.normal(k_m, (batch, n_m), jnp.float32)

    ref = _reference(m_t, weight.T, bias)

    # 1) f32, auto-derived tile (>= 2 grid steps, masked tail block).
    out = jax.block_until_ready(message_receiver(m_t, weight.T, bias))
    assert out.shape == (batch, n), out.shape
    assert jnp.allclose(out, ref.astype(out.dtype), atol=1e-5, rtol=1e-5), float(
        jnp.max(jnp.abs(out - ref)))

    # 2) f32, explicitly small tile -> multiple grid steps + partial tail.
    out2 = jax.block_until_ready(message_receiver(m_t, weight.T, bias, block_b=16))
    assert out2.shape == (batch, n), out2.shape
    assert jnp.allclose(out2, ref.astype(out2.dtype), atol=1e-5, rtol=1e-5), float(
        jnp.max(jnp.abs(out2 - ref)))

    # 3) bf16 I/O path (halves the dominant HBM traffic; f32 accumulation and
    #    f32 bias+GELU epilogue inside the kernel).
    out_bf16 = jax.block_until_ready(
        message_receiver(m_t.astype(jnp.bfloat16),
                         weight.T.astype(jnp.bfloat16),
                         bias.astype(jnp.bfloat16)))
    assert out_bf16.shape == (batch, n)
    assert out_bf16.dtype == jnp.bfloat16
    assert jnp.allclose(out_bf16.astype(jnp.float32), ref, atol=3e-2, rtol=3e-2), float(
        jnp.max(jnp.abs(out_bf16.astype(jnp.float32) - ref)))

    print("KERNEL_OK")
</pallas_src>

<mosaic_0001>
module attributes {stable_mosaic.version = 11 : i64} {
  func.func @_message_receiver_kernel(%arg0: i32, %arg1: memref<24x32xf32, #tpu.memory_space<vmem>>, %arg2: memref<32x128xf32, #tpu.memory_space<vmem>>, %arg3: memref<1x128xf32, #tpu.memory_space<vmem>>, %arg4: memref<24x128xf32, #tpu.memory_space<vmem>>) attributes {dimension_semantics = [#tpu.dimension_semantics<parallel>], iteration_bounds = array<i64: 2>, scalar_prefetch = 0 : i64, scratch_operands = 0 : i64, tpu.core_type = #tpu.core_type<tc>, window_params = [{transform_indices = @transform_0, window_bounds = array<i64: 24, 32>}, {pipeline_mode = #tpu.pipeline_mode<synchronous>, transform_indices = @transform_1, window_bounds = array<i64: 32, 128>}, {pipeline_mode = #tpu.pipeline_mode<synchronous>, transform_indices = @transform_2, window_bounds = array<i64: 1, 128>}, {transform_indices = @transform_3, window_bounds = array<i64: 24, 128>}]} {
    %c0 = arith.constant 0 : index
    %c0_0 = arith.constant 0 : index
    %0 = vector.load %arg1[%c0, %c0_0] : memref<24x32xf32, #tpu.memory_space<vmem>>, vector<24x32xf32>
    %c0_1 = arith.constant 0 : index
    %c0_2 = arith.constant 0 : index
    %1 = vector.load %arg2[%c0_1, %c0_2] : memref<32x128xf32, #tpu.memory_space<vmem>>, vector<32x128xf32>
    %cst = arith.constant dense<0.000000e+00> : vector<24x128xf32>
    %2 = tpu.matmul %0, %1, %cst {dimension_numbers = #tpu.dot_dimension_numbers<[1], [0], [0], [1], [0, 0, 1, 1], [], []>, precision = #tpu.contract_precision<fp32>} : vector<24x32xf32>, vector<32x128xf32>, vector<24x128xf32> -> vector<24x128xf32>
    %c0_3 = arith.constant 0 : index
    %c0_4 = arith.constant 0 : index
    %3 = vector.load %arg3[%c0_3, %c0_4] : memref<1x128xf32, #tpu.memory_space<vmem>>, vector<1x128xf32>
    %4 = vector.broadcast %3 : vector<1x128xf32> to vector<24x128xf32>
    %5 = arith.addf %2, %4 : vector<24x128xf32>
    %cst_5 = arith.constant 5.000000e-01 : f32
    %6 = vector.broadcast %cst_5 : f32 to vector<24x128xf32>
    %7 = arith.mulf %5, %6 : vector<24x128xf32>
    %cst_6 = arith.constant 0.707106769 : f32
    %8 = vector.broadcast %cst_6 : f32 to vector<24x128xf32>
    %9 = arith.mulf %5, %8 : vector<24x128xf32>
    %10 = math.erf %9 : vector<24x128xf32>
    %cst_7 = arith.constant 1.000000e+00 : f32
    %11 = vector.broadcast %cst_7 : f32 to vector<24x128xf32>
    %12 = arith.addf %11, %10 : vector<24x128xf32>
    %13 = arith.mulf %7, %12 : vector<24x128xf32>
    %c0_8 = arith.constant 0 : index
    %c0_9 = arith.constant 0 : index
    %14 = vector.load %arg4[%c0_8, %c0_9] : memref<24x128xf32, #tpu.memory_space<vmem>>, vector<24x128xf32>
    tpu.vector_store %arg4[%c0_8, %c0_9], %13 {strides = array<i32>} : memref<24x128xf32, #tpu.memory_space<vmem>>, vector<24x128xf32>,
    return
  }
  func.func @transform_0(%arg0: i32) -> (i32, i32) {
    %c0_i32 = arith.constant 0 : i32
    %c0_i32_0 = arith.constant 0 : i32
    return %arg0, %c0_i32 : i32, i32
  }
  func.func @transform_1(%arg0: i32) -> (i32, i32) {
    %c0_i32 = arith.constant 0 : i32
    %c0_i32_0 = arith.constant 0 : i32
    %c0_i32_1 = arith.constant 0 : i32
    return %c0_i32, %c0_i32_0 : i32, i32
  }
  func.func @transform_2(%arg0: i32) -> (i32, i32) {
    %c0_i32 = arith.constant 0 : i32
    %c0_i32_0 = arith.constant 0 : i32
    %c0_i32_1 = arith.constant 0 : i32
    return %c0_i32, %c0_i32_0 : i32, i32
  }
  func.func @transform_3(%arg0: i32) -> (i32, i32) {
    %c0_i32 = arith.constant 0 : i32
    %c0_i32_0 = arith.constant 0 : i32
    return %arg0, %c0_i32 : i32, i32
  }
}

</mosaic_0001>

<llo_original>
// kernel: message_receiver.1
$region0: #{message_receiver.1}
  #allocation0 [shape = 'u32[]', space=smem, size = 0x4, offset = 0x4, fixed_abs, tag = 'smem constant byte address 0x4 - core index']
  #allocation1 [shape = 'u32[144,128]{1,0:T(1,128)}', space=vmem, size = 0x12000, scoped, tag = 'internal scratch']
  %s0 = inlined_call_operand.vmem [shape: f32[40,32], index: 0, kind: input, shape index: {}]
  %s1 = inlined_call_operand.vmem [shape: f32[32,128], index: 1, kind: input, shape index: {}]
  %s2 = inlined_call_operand.vmem [shape: f32[1,128], index: 2, kind: input, shape index: {}]
  %s3 = inlined_call_operand.hbm [shape: f32[40,128], index: 3, kind: output, shape index: {}]
  %s4 = sld [smem:[#allocation0]]
  $region45: #{message_receiver.1} parent=0
    _
  %s6 = ssub.s32 1, %s4
  %s7 = scalar_select 0, %s6, %s4
  $region1: #{message_receiver.1} parent=0
    #allocation2 [shape = 'u8[24576]{0}', space=vmem, size = 0x6000, scoped, tag = 'output window, operand 0']
    #allocation3 [shape = 's32[2]{0}', space=sflag, size = 0x8, scoped, tag = 'scoped memory for message_receiver.1']
    %8 = vsyncpa [#allocation3], 0
    %s9 = scalar_lea.sflag [#allocation3], 1
    %10 = vsyncpa %s9, 0
    loop: start=0, step=1, limit=4
    $region2: #{message_receiver.1} parent=1 // loop_pre_header
      _
    $region3: #{message_receiver.1} parent=1 // loop_header
      %s12 = sphi 0, %s16
      %p13 = scmp.ge.s32.totalorder %s12, 4
      %s22 = sphi 0, %s24
      %s25 = sphi 0, %s22
      %s26 = sphi 0, %s25
      %s42 = sphi 0, %s26
      %s46 = sphi 0, %s46
      %s48 = sphi 0, %s46
      %s49 = sphi 0, %s48
      %s63 = sphi 0, %s49
      %s67 = sphi 0, %s67
      %s69 = sphi 0, %s67
      %s70 = sphi 0, %s69
      %s84 = sphi 0, %s70
      %s90 = sphi 0, %s92
      %s93 = sphi 0, %s90
      %s94 = sphi 0, %s93
      %s110 = sphi 0, %s94
    $region4: #{message_receiver.1} parent=1 // loop_header_branch
      %15 = sbr.rel (%p13) target = $region8
    $region5: #{message_receiver.1} parent=1 // loop_body
      %s17 = ssub.s32 %s12, 1
      %s18 = ssub.s32 %s12, 2
      %s19 = sadd.s32 %s12, 1
      %s20 = ssub.s32 %s12, %s19
      %p21 = scmp.eq.s32.totalorder %s20, 0
      %s23 = sadd.s32 %s22, 1
      %s24 = scalar_select %p21, %s22, %s23
      %p27 = pneg %p21
      %p28 = scmp.eq.s32.totalorder %s12, 1
      %p29 = por %p27, %p28
      %p30 = scmp.ne.s32.totalorder %s22, %s25
      %p31 = scmp.eq.s32.totalorder %s12, 0
      %p32 = por %p30, %p31
      %p33 = scmp.ne.s32.totalorder %s22, %s25
      %p34 = scmp.eq.s32.totalorder %s17, 1
      %p35 = por %p33, %p34
      %p36 = scmp.ne.s32.totalorder %s25, %s26
      %p37 = scmp.eq.s32.totalorder %s17, 0
      %p38 = por %p36, %p37
      %p39 = scmp.ne.s32.totalorder %s25, %s26
      %p40 = scmp.eq.s32.totalorder %s18, 1
      %p41 = por %p39, %p40
      %p43 = scmp.ne.s32.totalorder %s26, %s42
      %p44 = scmp.eq.s32.totalorder %s18, 0
      %p45 = por %p43, %p44
      %s47 = sadd.s32 %s46, 1
      %p50 = scmp.eq.s32.totalorder %s12, 1
      %p51 = scmp.ne.s32.totalorder %s46, %s48
      %p52 = scmp.eq.s32.totalorder %s12, 0
      %p53 = por %p51, %p52
      %p54 = scmp.ne.s32.totalorder %s46, %s48
      %p55 = scmp.eq.s32.totalorder %s17, 1
      %p56 = por %p54, %p55
      %p57 = scmp.ne.s32.totalorder %s48, %s49
      %p58 = scmp.eq.s32.totalorder %s17, 0
      %p59 = por %p57, %p58
      %p60 = scmp.ne.s32.totalorder %s48, %s49
      %p61 = scmp.eq.s32.totalorder %s18, 1
      %p62 = por %p60, %p61
      %p64 = scmp.ne.s32.totalorder %s49, %s63
      %p65 = scmp.eq.s32.totalorder %s18, 0
      %p66 = por %p64, %p65
      %s68 = sadd.s32 %s67, 1
      %p71 = scmp.eq.s32.totalorder %s12, 1
      %p72 = scmp.ne.s32.totalorder %s67, %s69
      %p73 = scmp.eq.s32.totalorder %s12, 0
      %p74 = por %p72, %p73
      %p75 = scmp.ne.s32.totalorder %s67, %s69
      %p76 = scmp.eq.s32.totalorder %s17, 1
      %p77 = por %p75, %p76
      %p78 = scmp.ne.s32.totalorder %s69, %s70
      %p79 = scmp.eq.s32.totalorder %s17, 0
      %p80 = por %p78, %p79
      %p81 = scmp.ne.s32.totalorder %s69, %s70
      %p82 = scmp.eq.s32.totalorder %s18, 1
      %p83 = por %p81, %p82
      %p85 = scmp.ne.s32.totalorder %s70, %s84
      %p86 = scmp.eq.s32.totalorder %s18, 0
      %p87 = por %p85, %p86
      %s88 = ssub.s32 %s12, %s19
      %p89 = scmp.eq.s32.totalorder %s88, 0
      %s91 = sadd.s32 %s90, 1
      %s92 = scalar_select %p89, %s90, %s91
      %p95 = pneg %p89
      %p96 = scmp.eq.s32.totalorder %s12, 1
      %p97 = por %p95, %p96
      %p98 = scmp.ne.s32.totalorder %s90, %s93
      %p99 = scmp.eq.s32.totalorder %s12, 0
      %p100 = por %p98, %p99
      %p101 = scmp.ne.s32.totalorder %s90, %s93
      %p102 = scmp.eq.s32.totalorder %s17, 1
      %p103 = por %p101, %p102
      %p104 = scmp.ne.s32.totalorder %s93, %s94
      %p105 = scmp.eq.s32.totalorder %s17, 0
      %p106 = por %p104, %p105
      %p107 = scmp.ne.s32.totalorder %s93, %s94
      %p108 = scmp.eq.s32.totalorder %s18, 1
      %p109 = por %p107, %p108
      %p111 = scmp.ne.s32.totalorder %s94, %s110
      %p112 = scmp.eq.s32.totalorder %s18, 0
      %p113 = por %p111, %p112
      %p114 = scmp.le.s32.totalorder 1, %s12
      %p115 = scmp.lt.s32.totalorder %s12, 3
      %p116 = pnand %p114, %p115
      %p117 = pneg %p116
      // Predicated region
      $region9: #{message_receiver.1} parent=5 // pred_check
        _
      $region10: #{message_receiver.1} parent=5 // pred_check_branch
        %119 = sbr.rel (%p116) target = $region12
      $region11: #{message_receiver.1} parent=5 // pred_region
        %s120 = ssub.s32 %s12, 1
        // Predicated region
        $region13: #{message_receiver.1} parent=11 // pred_check
          %p121 = pneg %p59
        $region14: #{message_receiver.1} parent=11 // pred_check_branch
          %123 = sbr.rel (%p121) target = $region16
        $region15: #{message_receiver.1} parent=11 // pred_region
          _
        $region16: #{message_receiver.1} parent=11 // pred_fallthru
          _
        // Predicated region
        $region17: #{message_receiver.1} parent=11 // pred_check
          %p124 = pneg %p80
        $region18: #{message_receiver.1} parent=11 // pred_check_branch
          %126 = sbr.rel (%p124) target = $region20
        $region19: #{message_receiver.1} parent=11 // pred_region
          _
        $region20: #{message_receiver.1} parent=11 // pred_fallthru
          _
      $region12: #{message_receiver.1} parent=5 // pred_fallthru
        _
      %p127 = scmp.lt.s32.totalorder %s12, 2
      // Predicated region
      $region21: #{message_receiver.1} parent=5 // pred_check
        %p128 = pneg %p127
      $region22: #{message_receiver.1} parent=5 // pred_check_branch
        %130 = sbr.rel (%p128) target = $region24
      $region23: #{message_receiver.1} parent=5 // pred_region
        // Predicated region
        $region25: #{message_receiver.1} parent=23 // pred_check
          %p131 = pneg %p32
        $region26: #{message_receiver.1} parent=23 // pred_check_branch
          %133 = sbr.rel (%p131) target = $region28
        $region27: #{message_receiver.1} parent=23 // pred_region
          %s134 = smul.u32 3, %s12
          %s135 = ssub.s32 5, %s134
          %p136 = scmp.lt.s32.totalorder %s135, 3
          %s137 = scalar_select %p136, %s135, 3
          %s138 = smul.u32 128, %s137
          %p139 = scmp.lt.s32.totalorder %s134, 4
          %s140 = scalar_select %p139, %s134, 4
          %s141 = smul.addr %s140, 8
          %s142 = scalar_lea.vmem %s0, %s141
          %s143 = smul.u32 3, %s12
          %s144 = ssub.s32 5, %s143
          %p145 = scmp.lt.s32.totalorder %s144, 3
          %s146 = scalar_select %p145, %s144, 3
          %s147 = smul.u32 128, %s146
        $region28: #{message_receiver.1} parent=23 // pred_fallthru
          _
      $region24: #{message_receiver.1} parent=5 // pred_fallthru
        _
      %p148 = scmp.le.s32.totalorder 1, %s12
      %p149 = scmp.lt.s32.totalorder %s12, 3
      %p150 = pnand %p148, %p149
      %p151 = pneg %p150
      // Predicated region
      $region29: #{message_receiver.1} parent=5 // pred_check
        _
      $region30: #{message_receiver.1} parent=5 // pred_check_branch
        %153 = sbr.rel (%p150) target = $region32
      $region31: #{message_receiver.1} parent=5 // pred_region
        %s154 = ssub.s32 %s12, 1
        %s155 = smul.u32 3, %s17
        %s156 = ssub.s32 5, %s155
        %p157 = scmp.lt.s32.totalorder %s156, 3
        %s158 = scalar_select %p157, %s156, 3
        %s159 = smul.u32 128, %s158
        %p160 = scmp.lt.s32.totalorder %s155, 4
        %s161 = scalar_select %p160, %s155, 4
        %s162 = smul.addr %s161, 8
        %s163 = scalar_lea.vmem %s0, %s162
        %p164 = pneg %p38
        %p165 = pneg %p35
        %p166 = pneg %p59
        %p167 = pneg %p56
        %p168 = pneg %p80
        %p169 = pneg %p77
        %p170 = pneg %p106
        %p171 = pneg %p103
        %s172 = sand.u32 %s93, 1
        %s173 = scalar_lea.sflag [#allocation3], %s172
        %s174 = sand.u32 %s93, 1
        %s175 = smul.addr %s174, 24
        %s176 = scalar_lea.vmem [#allocation2], %s175
        %s177 = smul.u32 3, %s17
        %s178 = ssub.s32 5, %s177
        %p179 = scmp.lt.s32.totalorder %s178, 3
        %s180 = scalar_select %p179, %s178, 3
        %s181 = smul.u32 128, %s180
        %p182 = scmp.lt.s32.totalorder %s177, 4
        %s183 = scalar_select %p182, %s177, 4
        %s184 = smul.addr %s183, 8
        %s185 = scalar_lea.vmem %s0, %s184
        %s186 = smul.u32 3, %s17
        %s187 = ssub.s32 5, %s186
        %p188 = scmp.lt.s32.totalorder %s187, 3
        %s189 = scalar_select %p188, %s187, 3
        %s190 = smul.u32 128, %s189
        %s191 = smul.u32 3, %s17
        %s192 = ssub.s32 5, %s191
        %p193 = scmp.lt.s32.totalorder %s192, 3
        %s194 = scalar_select %p193, %s192, 3
        %s195 = smul.u32 128, %s194
        %v196 = vld [vmem:[%s185] sm:$0xff]
        %v197 = vld [vmem:[%s185 + $0x8] sm:$0xff]
        %v198 = vld [vmem:[%s185 + $0x10] sm:$0xff]
        %v199 = vld [vmem:[%s1] sm:$0xff]
        %v200 = vld [vmem:[%s1 + $0x8] sm:$0xff]
        %v201 = vld [vmem:[%s1 + $0x10] sm:$0xff]
        %v202 = vld [vmem:[%s1 + $0x18] sm:$0xff]
        %v203 = vld [vmem:[%s2] sm:$0x1]
        %v205 = vlaneseq
        %v206 = vshrl.u32 %v205, 7
        %v207 = vsub.s32 0, %v206
        %v208 = vrot.slane %v203, %v207
        %vm210 = vcmask 261120
        %v212 = vsel %vm210, %v196, 0
        %v215 = vsel %vm210, %v197, 0
        %v218 = vsel %vm210, %v198, 0
        %220 = vmatprep.subr.mxu0 0.0
        %v221 = vand.u32 %v199, 4294901760
        %222 = vmatpush1.msra.mxu0 %v221
        %223 = vmatprep.subr.mxu0 0.0
        %v224 = vand.u32 %v200, 4294901760
        %225 = vmatpush1.msra.mxu0 %v224
        %226 = vmatprep.subr.mxu0 0.0
        %v227 = vand.u32 %v201, 4294901760
        %228 = vmatpush1.msra.mxu0 %v227
        %229 = vmatprep.subr.mxu0 0.0
        %v230 = vand.u32 %v202, 4294901760
        %231 = vmatpush1.msra.mxu0 %v230
        %232 = vmatprep.subr.mxu0 0.0
        %233 = vmatpush1.msra.mxu0 0.0
        %234 = vmatprep.subr.mxu0 0.0
        %235 = vmatpush1.msra.mxu0 0.0
        %236 = vmatprep.subr.mxu0 0.0
        %237 = vmatpush1.msra.mxu0 0.0
        %238 = vmatprep.subr.mxu0 0.0
        %239 = vmatpush1.msra.mxu0 0.0
        %240 = vmatprep.subr.mxu0 0.0
        %241 = vmatpush1.msra.mxu0 0.0
        %242 = vmatprep.subr.mxu0 0.0
        %243 = vmatpush1.msra.mxu0 0.0
        %244 = vmatprep.subr.mxu0 0.0
        %245 = vmatpush1.msra.mxu0 0.0
        %246 = vmatprep.subr.mxu0 0.0
        %247 = vmatpush1.msra.mxu0 0.0
        %248 = vmatprep.subr.mxu0 0.0
        %249 = vmatpush1.msra.mxu0 0.0
        %250 = vmatprep.subr.mxu0 0.0
        %251 = vmatpush1.msra.mxu0 0.0
        %252 = vmatprep.subr.mxu0 0.0
        %253 = vmatpush1.msra.mxu0 0.0
        %254 = vmatprep.subr.mxu0 0.0
        %255 = vmatpush1.msra.mxu0 0.0
        %256 = vmatprep.subr.mxu0 0.0
        %257 = vmatpush1.msra.mxu0 0.0
        %258 = vmatprep.subr.mxu0 0.0
        %259 = vmatpush1.msra.mxu0 0.0
        %260 = vmatprep.subr.mxu0 0.0
        %261 = vmatpush1.msra.mxu0 0.0
        %262 = vmatprep.subr.mxu0 0.0
        %263 = vmatpush1.msra.mxu0 0.0
        %264 = vmatprep.subr.mxu0 0.0
        %265 = vmatpush1.msra.mxu0 0.0
        %266 = vmatprep.subr.mxu0 0.0
        %267 = vmatpush1.msra.mxu0 0.0
        %268 = vmatprep.subr.mxu0 0.0
        %269 = vmatpush1.msra.mxu0 0.0
        %270 = vmatprep.subr.mxu0 0.0
        %271 = vmatpush1.msra.mxu0 0.0
        %272 = vmatprep.subr.mxu0 0.0
        %273 = vmatpush1.msra.mxu0 0.0
        %274 = vmatprep.subr.mxu0 0.0
        %275 = vmatpush1.msra.mxu0 0.0
        %276 = vmatprep.subr.mxu0 0.0
        %277 = vmatpush1.msra.mxu0 0.0
        %278 = vmatprep.subr.mxu0 0.0
        %279 = vmatpush1.msra.mxu0 0.0
        %280 = vmatprep.subr.mxu0 0.0
        %281 = vmatpush1.msra.mxu0 0.0
        %282 = vmatprep.subr.mxu0 0.0
        %283 = vmatpush1.msra.mxu0 0.0
        %284 = vmatprep.subr.mxu0 0.0
        %285 = vmatpush1.msra.mxu0 0.0
        %286 = vmatprep.subr.mxu0 0.0
        %287 = vmatpush1.msra.mxu0 0.0
        %288 = vmatprep.mubr.f32.mxu0 0.0
        %v289 = vand.u32 %v212, 4294901760
        %v290 = vsub.f32 %v212, %v289
        %v291 = vand.u32 %v290, 4294901760
        %v292 = vsub.f32 %v290, %v291
        %v293 = vand.u32 %v292, 4294901760
        %294 = vmatmul.mubr.f32.gmra.mrb[0].mxu0 %v293
        %v295 = vpop.f32.mrb[0].mxu0
        %v296 = vadd.f32 %v208, %v295
        %v297 = vpop.f32.mrb[0].mxu0
        %298 = vmatprep.mubr.f32.mxu0 0.0
        %v299 = vand.u32 %v215, 4294901760
        %v300 = vsub.f32 %v215, %v299
        %v301 = vand.u32 %v300, 4294901760
        %v302 = vsub.f32 %v300, %v301
        %v303 = vand.u32 %v302, 4294901760
        %304 = vmatmul.mubr.f32.gmra.mrb[0].mxu0 %v303
        %v305 = vpop.f32.mrb[0].mxu0
        %v306 = vadd.f32 %v208, %v305
        %v307 = vpop.f32.mrb[0].mxu0
        %308 = vmatprep.mubr.f32.mxu0 0.0
        %v309 = vand.u32 %v218, 4294901760
        %v310 = vsub.f32 %v218, %v309
        %v311 = vand.u32 %v310, 4294901760
        %v312 = vsub.f32 %v310, %v311
        %v313 = vand.u32 %v312, 4294901760
        %314 = vmatmul.mubr.f32.gmra.mrb[0].mxu0 %v313
        %v315 = vpop.f32.mrb[0].mxu0
        %v316 = vadd.f32 %v208, %v315
        %v317 = vpop.f32.mrb[0].mxu0
        %318 = vdwg.mxu0
        %319 = vmatprep.subr.mxu0 0.0
        %v320 = vand.u32 %v199, 4294901760
        %v321 = vsub.f32 %v199, %v320
        %v322 = vand.u32 %v321, 4294901760
        %v323 = vsub.f32 %v321, %v322
        %v324 = vand.u32 %v323, 4294901760
        %325 = vmatpush1.msra.mxu0 %v324
        %326 = vmatprep.subr.mxu0 0.0
        %v327 = vand.u32 %v200, 4294901760
        %v328 = vsub.f32 %v200, %v327
        %v329 = vand.u32 %v328, 4294901760
        %v330 = vsub.f32 %v328, %v329
        %v331 = vand.u32 %v330, 4294901760
        %332 = vmatpush1.msra.mxu0 %v331
        %333 = vmatprep.subr.mxu0 0.0
        %v334 = vand.u32 %v201, 4294901760
        %v335 = vsub.f32 %v201, %v334
        %v336 = vand.u32 %v335, 4294901760
        %v337 = vsub.f32 %v335, %v336
        %v338 = vand.u32 %v337, 4294901760
        %339 = vmatpush1.msra.mxu0 %v338
        %340 = vmatprep.subr.mxu0 0.0
        %v341 = vand.u32 %v202, 4294901760
        %v342 = vsub.f32 %v202, %v341
        %v343 = vand.u32 %v342, 4294901760
        %v344 = vsub.f32 %v342, %v343
        %v345 = vand.u32 %v344, 4294901760
        %346 = vmatpush1.msra.mxu0 %v345
        %347 = vmatprep.subr.mxu0 0.0
        %348 = vmatpush1.msra.mxu0 0.0
        %349 = vmatprep.subr.mxu0 0.0
        %350 = vmatpush1.msra.mxu0 0.0
        %351 = vmatprep.subr.mxu0 0.0
        %352 = vmatpush1.msra.mxu0 0.0
        %353 = vmatprep.subr.mxu0 0.0
        %354 = vmatpush1.msra.mxu0 0.0
        %355 = vmatprep.subr.mxu0 0.0
        %356 = vmatpush1.msra.mxu0 0.0
        %357 = vmatprep.subr.mxu0 0.0
        %358 = vmatpush1.msra.mxu0 0.0
        %359 = vmatprep.subr.mxu0 0.0
        %360 = vmatpush1.msra.mxu0 0.0
        %361 = vmatprep.subr.mxu0 0.0
        %362 = vmatpush1.msra.mxu0 0.0
        %363 = vmatprep.subr.mxu0 0.0
        %364 = vmatpush1.msra.mxu0 0.0
        %365 = vmatprep.subr.mxu0 0.0
        %366 = vmatpush1.msra.mxu0 0.0
        %367 = vmatprep.subr.mxu0 0.0
        %368 = vmatpush1.msra.mxu0 0.0
        %369 = vmatprep.subr.mxu0 0.0
        %370 = vmatpush1.msra.mxu0 0.0
        %371 = vmatprep.subr.mxu0 0.0
        %372 = vmatpush1.msra.mxu0 0.0
        %373 = vmatprep.subr.mxu0 0.0
        %374 = vmatpush1.msra.mxu0 0.0
        %375 = vmatprep.subr.mxu0 0.0
        %376 = vmatpush1.msra.mxu0 0.0
        %377 = vmatprep.subr.mxu0 0.0
        %378 = vmatpush1.msra.mxu0 0.0
        %379 = vmatprep.subr.mxu0 0.0
        %380 = vmatpush1.msra.mxu0 0.0
        %381 = vmatprep.subr.mxu0 0.0
        %382 = vmatpush1.msra.mxu0 0.0
        %383 = vmatprep.subr.mxu0 0.0
        %384 = vmatpush1.msra.mxu0 0.0
        %385 = vmatprep.subr.mxu0 0.0
        %386 = vmatpush1.msra.mxu0 0.0
        %387 = vmatprep.subr.mxu0 0.0
        %388 = vmatpush1.msra.mxu0 0.0
        %389 = vmatprep.subr.mxu0 0.0
        %390 = vmatpush1.msra.mxu0 0.0
        %391 = vmatprep.subr.mxu0 0.0
        %392 = vmatpush1.msra.mxu0 0.0
        %393 = vmatprep.subr.mxu0 0.0
        %394 = vmatpush1.msra.mxu0 0.0
        %395 = vmatprep.subr.mxu0 0.0
        %396 = vmatpush1.msra.mxu0 0.0
        %397 = vmatprep.subr.mxu0 0.0
        %398 = vmatpush1.msra.mxu0 0.0
        %399 = vmatprep.subr.mxu0 0.0
        %400 = vmatpush1.msra.mxu0 0.0
        %401 = vmatprep.subr.mxu0 0.0
        %402 = vmatpush1.msra.mxu0 0.0
        %403 = vmatprep.mubr.f32.mxu0 0.0
        %v404 = vand.u32 %v212, 4294901760
        %405 = vmatmul.mubr.f32.gmra.mrb[0].mxu0 %v404
        %v406 = vpop.f32.mrb[0].mxu0
        %v407 = vadd.f32 %v296, %v406
        %v408 = vpop.f32.mrb[0].mxu0
        %409 = vmatprep.mubr.f32.mxu0 0.0
        %v410 = vand.u32 %v215, 4294901760
        %411 = vmatmul.mubr.f32.gmra.mrb[0].mxu0 %v410
        %v412 = vpop.f32.mrb[0].mxu0
        %v413 = vadd.f32 %v306, %v412
        %v414 = vpop.f32.mrb[0].mxu0
        %415 = vmatprep.mubr.f32.mxu0 0.0
        %v416 = vand.u32 %v218, 4294901760
        %417 = vmatmul.mubr.f32.gmra.mrb[0].mxu0 %v416
        %v418 = vpop.f32.mrb[0].mxu0
        %v419 = vadd.f32 %v316, %v418
        %v420 = vpop.f32.mrb[0].mxu0
        %421 = vdwg.mxu0
        %422 = vmatprep.subr.mxu0 0.0
        %v423 = vand.u32 %v199, 4294901760
        %v424 = vsub.f32 %v199, %v423
        %425 = vmatpush1.msra.mxu0 %v424
        %426 = vmatprep.subr.mxu0 0.0
        %v427 = vand.u32 %v200, 4294901760
        %v428 = vsub.f32 %v200, %v427
        %429 = vmatpush1.msra.mxu0 %v428
        %430 = vmatprep.subr.mxu0 0.0
        %v431 = vand.u32 %v201, 4294901760
        %v432 = vsub.f32 %v201, %v431
        %433 = vmatpush1.msra.mxu0 %v432
        %434 = vmatprep.subr.mxu0 0.0
        %v435 = vand.u32 %v202, 4294901760
        %v436 = vsub.f32 %v202, %v435
        %437 = vmatpush1.msra.mxu0 %v436
        %438 = vmatprep.subr.mxu0 0.0
        %439 = vmatpush1.msra.mxu0 0.0
        %440 = vmatprep.subr.mxu0 0.0
        %441 = vmatpush1.msra.mxu0 0.0
        %442 = vmatprep.subr.mxu0 0.0
        %443 = vmatpush1.msra.mxu0 0.0
        %444 = vmatprep.subr.mxu0 0.0
        %445 = vmatpush1.msra.mxu0 0.0
        %446 = vmatprep.subr.mxu0 0.0
        %447 = vmatpush1.msra.mxu0 0.0
        %448 = vmatprep.subr.mxu0 0.0
        %449 = vmatpush1.msra.mxu0 0.0
        %450 = vmatprep.subr.mxu0 0.0
        %451 = vmatpush1.msra.mxu0 0.0
        %452 = vmatprep.subr.mxu0 0.0
        %453 = vmatpush1.msra.mxu0 0.0
        %454 = vmatprep.subr.mxu0 0.0
        %455 = vmatpush1.msra.mxu0 0.0
        %456 = vmatprep.subr.mxu0 0.0
        %457 = vmatpush1.msra.mxu0 0.0
        %458 = vmatprep.subr.mxu0 0.0
        %459 = vmatpush1.msra.mxu0 0.0
        %460 = vmatprep.subr.mxu0 0.0
        %461 = vmatpush1.msra.mxu0 0.0
        %462 = vmatprep.subr.mxu0 0.0
        %463 = vmatpush1.msra.mxu0 0.0
        %464 = vmatprep.subr.mxu0 0.0
        %465 = vmatpush1.msra.mxu0 0.0
        %466 = vmatprep.subr.mxu0 0.0
        %467 = vmatpush1.msra.mxu0 0.0
        %468 = vmatprep.subr.mxu0 0.0
        %469 = vmatpush1.msra.mxu0 0.0
        %470 = vmatprep.subr.mxu0 0.0
        %471 = vmatpush1.msra.mxu0 0.0
        %472 = vmatprep.subr.mxu0 0.0
        %473 = vmatpush1.msra.mxu0 0.0
        %474 = vmatprep.subr.mxu0 0.0
        %475 = vmatpush1.msra.mxu0 0.0
        %476 = vmatprep.subr.mxu0 0.0
        %477 = vmatpush1.msra.mxu0 0.0
        %478 = vmatprep.subr.mxu0 0.0
        %479 = vmatpush1.msra.mxu0 0.0
        %480 = vmatprep.subr.mxu0 0.0
        %481 = vmatpush1.msra.mxu0 0.0
        %482 = vmatprep.subr.mxu0 0.0
        %483 = vmatpush1.msra.mxu0 0.0
        %484 = vmatprep.subr.mxu0 0.0
        %485 = vmatpush1.msra.mxu0 0.0
        %486 = vmatprep.subr.mxu0 0.0
        %487 = vmatpush1.msra.mxu0 0.0
        %488 = vmatprep.subr.mxu0 0.0
        %489 = vmatpush1.msra.mxu0 0.0
        %490 = vmatprep.subr.mxu0 0.0
        %491 = vmatpush1.msra.mxu0 0.0
        %492 = vmatprep.subr.mxu0 0.0
        %493 = vmatpush1.msra.mxu0 0.0
        %494 = vmatprep.mubr.f32.mxu0 0.0
        %v495 = vand.u32 %v212, 4294901760
        %v496 = vsub.f32 %v212, %v495
        %497 = vmatmul.mubr.f32.gmra.mrb[0].mxu0 %v496
        %v498 = vpop.f32.mrb[0].mxu0
        %v499 = vadd.f32 %v407, %v498
        %v500 = vpop.f32.mrb[0].mxu0
        %501 = vmatprep.mubr.f32.mxu0 0.0
        %v502 = vand.u32 %v215, 4294901760
        %v503 = vsub.f32 %v215, %v502
        %504 = vmatmul.mubr.f32.gmra.mrb[0].mxu0 %v503
        %v505 = vpop.f32.mrb[0].mxu0
        %v506 = vadd.f32 %v413, %v505
        %v507 = vpop.f32.mrb[0].mxu0
        %508 = vmatprep.mubr.f32.mxu0 0.0
        %v509 = vand.u32 %v218, 4294901760
        %v510 = vsub.f32 %v218, %v509
        %511 = vmatmul.mubr.f32.gmra.mrb[0].mxu0 %v510
        %v512 = vpop.f32.mrb[0].mxu0
        %v513 = vadd.f32 %v419, %v512
        %v514 = vpop.f32.mrb[0].mxu0
        %515 = vdwg.mxu0
        %516 = vmatprep.subr.mxu0 0.0
        %v517 = vand.u32 %v199, 4294901760
        %518 = vmatpush1.msra.mxu0 %v517
        %519 = vmatprep.subr.mxu0 0.0
        %v520 = vand.u32 %v200, 4294901760
        %521 = vmatpush1.msra.mxu0 %v520
        %522 = vmatprep.subr.mxu0 0.0
        %v523 = vand.u32 %v201, 4294901760
        %524 = vmatpush1.msra.mxu0 %v523
        %525 = vmatprep.subr.mxu0 0.0
        %v526 = vand.u32 %v202, 4294901760
        %527 = vmatpush1.msra.mxu0 %v526
        %528 = vmatprep.subr.mxu0 0.0
        %529 = vmatpush1.msra.mxu0 0.0
        %530 = vmatprep.subr.mxu0 0.0
        %531 = vmatpush1.msra.mxu0 0.0
        %532 = vmatprep.subr.mxu0 0.0
        %533 = vmatpush1.msra.mxu0 0.0
        %534 = vmatprep.subr.mxu0 0.0
        %535 = vmatpush1.msra.mxu0 0.0
        %536 = vmatprep.subr.mxu0 0.0
        %537 = vmatpush1.msra.mxu0 0.0
        %538 = vmatprep.subr.mxu0 0.0
        %539 = vmatpush1.msra.mxu0 0.0
        %540 = vmatprep.subr.mxu0 0.0
        %541 = vmatpush1.msra.mxu0 0.0
        %542 = vmatprep.subr.mxu0 0.0
        %543 = vmatpush1.msra.mxu0 0.0
        %544 = vmatprep.subr.mxu0 0.0
        %545 = vmatpush1.msra.mxu0 0.0
        %546 = vmatprep.subr.mxu0 0.0
        %547 = vmatpush1.msra.mxu0 0.0
        %548 = vmatprep.subr.mxu0 0.0
        %549 = vmatpush1.msra.mxu0 0.0
        %550 = vmatprep.subr.mxu0 0.0
        %551 = vmatpush1.msra.mxu0 0.0
        %552 = vmatprep.subr.mxu0 0.0
        %553 = vmatpush1.msra.mxu0 0.0
        %554 = vmatprep.subr.mxu0 0.0
        %555 = vmatpush1.msra.mxu0 0.0
        %556 = vmatprep.subr.mxu0 0.0
        %557 = vmatpush1.msra.mxu0 0.0
        %558 = vmatprep.subr.mxu0 0.0
        %559 = vmatpush1.msra.mxu0 0.0
        %560 = vmatprep.subr.mxu0 0.0
        %561 = vmatpush1.msra.mxu0 0.0
        %562 = vmatprep.subr.mxu0 0.0
        %563 = vmatpush1.msra.mxu0 0.0
        %564 = vmatprep.subr.mxu0 0.0
        %565 = vmatpush1.msra.mxu0 0.0
        %566 = vmatprep.subr.mxu0 0.0
        %567 = vmatpush1.msra.mxu0 0.0
        %568 = vmatprep.subr.mxu0 0.0
        %569 = vmatpush1.msra.mxu0 0.0
        %570 = vmatprep.subr.mxu0 0.0
        %571 = vmatpush1.msra.mxu0 0.0
        %572 = vmatprep.subr.mxu0 0.0
        %573 = vmatpush1.msra.mxu0 0.0
        %574 = vmatprep.subr.mxu0 0.0
        %575 = vmatpush1.msra.mxu0 0.0
        %576 = vmatprep.subr.mxu0 0.0
        %577 = vmatpush1.msra.mxu0 0.0
        %578 = vmatprep.subr.mxu0 0.0
        %579 = vmatpush1.msra.mxu0 0.0
        %580 = vmatprep.subr.mxu0 0.0
        %581 = vmatpush1.msra.mxu0 0.0
        %582 = vmatprep.subr.mxu0 0.0
        %583 = vmatpush1.msra.mxu0 0.0
        %584 = vmatprep.mubr.f32.mxu0 0.0
        %v585 = vand.u32 %v212, 4294901760
        %v586 = vsub.f32 %v212, %v585
        %v587 = vand.u32 %v586, 4294901760
        %588 = vmatmul.mubr.f32.gmra.mrb[0].mxu0 %v587
        %v589 = vpop.f32.mrb[0].mxu0
        %v590 = vadd.f32 %v499, %v589
        %v591 = vpop.f32.mrb[0].mxu0
        %592 = vmatprep.mubr.f32.mxu0 0.0
        %v593 = vand.u32 %v215, 4294901760
        %v594 = vsub.f32 %v215, %v593
        %v595 = vand.u32 %v594, 4294901760
        %596 = vmatmul.mubr.f32.gmra.mrb[0].mxu0 %v595
        %v597 = vpop.f32.mrb[0].mxu0
        %v598 = vadd.f32 %v506, %v597
        %v599 = vpop.f32.mrb[0].mxu0
        %600 = vmatprep.mubr.f32.mxu0 0.0
        %v601 = vand.u32 %v218, 4294901760
        %v602 = vsub.f32 %v218, %v601
        %v603 = vand.u32 %v602, 4294901760
        %604 = vmatmul.mubr.f32.gmra.mrb[0].mxu0 %v603
        %v605 = vpop.f32.mrb[0].mxu0
        %v606 = vadd.f32 %v513, %v605
        %v607 = vpop.f32.mrb[0].mxu0
        %608 = vdwg.mxu0
        %609 = vmatprep.subr.mxu0 0.0
        %v610 = vand.u32 %v199, 4294901760
        %v611 = vsub.f32 %v199, %v610
        %v612 = vand.u32 %v611, 4294901760
        %613 = vmatpush1.msra.mxu0 %v612
        %614 = vmatprep.subr.mxu0 0.0
        %v615 = vand.u32 %v200, 4294901760
        %v616 = vsub.f32 %v200, %v615
        %v617 = vand.u32 %v616, 4294901760
        %618 = vmatpush1.msra.mxu0 %v617
        %619 = vmatprep.subr.mxu0 0.0
        %v620 = vand.u32 %v201, 4294901760
        %v621 = vsub.f32 %v201, %v620
        %v622 = vand.u32 %v621, 4294901760
        %623 = vmatpush1.msra.mxu0 %v622
        %624 = vmatprep.subr.mxu0 0.0
        %v625 = vand.u32 %v202, 4294901760
        %v626 = vsub.f32 %v202, %v625
        %v627 = vand.u32 %v626, 4294901760
        %628 = vmatpush1.msra.mxu0 %v627
        %629 = vmatprep.subr.mxu0 0.0
        %630 = vmatpush1.msra.mxu0 0.0
        %631 = vmatprep.subr.mxu0 0.0
        %632 = vmatpush1.msra.mxu0 0.0
        %633 = vmatprep.subr.mxu0 0.0
        %634 = vmatpush1.msra.mxu0 0.0
        %635 = vmatprep.subr.mxu0 0.0
        %636 = vmatpush1.msra.mxu0 0.0
        %637 = vmatprep.subr.mxu0 0.0
        %638 = vmatpush1.msra.mxu0 0.0
        %639 = vmatprep.subr.mxu0 0.0
        %640 = vmatpush1.msra.mxu0 0.0
        %641 = vmatprep.subr.mxu0 0.0
        %642 = vmatpush1.msra.mxu0 0.0
        %643 = vmatprep.subr.mxu0 0.0
        %644 = vmatpush1.msra.mxu0 0.0
        %645 = vmatprep.subr.mxu0 0.0
        %646 = vmatpush1.msra.mxu0 0.0
        %647 = vmatprep.subr.mxu0 0.0
        %648 = vmatpush1.msra.mxu0 0.0
        %649 = vmatprep.subr.mxu0 0.0
        %650 = vmatpush1.msra.mxu0 0.0
        %651 = vmatprep.subr.mxu0 0.0
        %652 = vmatpush1.msra.mxu0 0.0
        %653 = vmatprep.subr.mxu0 0.0
        %654 = vmatpush1.msra.mxu0 0.0
        %655 = vmatprep.subr.mxu0 0.0
        %656 = vmatpush1.msra.mxu0 0.0
        %657 = vmatprep.subr.mxu0 0.0
        %658 = vmatpush1.msra.mxu0 0.0
        %659 = vmatprep.subr.mxu0 0.0
        %660 = vmatpush1.msra.mxu0 0.0
        %661 = vmatprep.subr.mxu0 0.0
        %662 = vmatpush1.msra.mxu0 0.0
        %663 = vmatprep.subr.mxu0 0.0
        %664 = vmatpush1.msra.mxu0 0.0
        %665 = vmatprep.subr.mxu0 0.0
        %666 = vmatpush1.msra.mxu0 0.0
        %667 = vmatprep.subr.mxu0 0.0
        %668 = vmatpush1.msra.mxu0 0.0
        %669 = vmatprep.subr.mxu0 0.0
        %670 = vmatpush1.msra.mxu0 0.0
        %671 = vmatprep.subr.mxu0 0.0
        %672 = vmatpush1.msra.mxu0 0.0
        %673 = vmatprep.subr.mxu0 0.0
        %674 = vmatpush1.msra.mxu0 0.0
        %675 = vmatprep.subr.mxu0 0.0
        %676 = vmatpush1.msra.mxu0 0.0
        %677 = vmatprep.subr.mxu0 0.0
        %678 = vmatpush1.msra.mxu0 0.0
        %679 = vmatprep.subr.mxu0 0.0
        %680 = vmatpush1.msra.mxu0 0.0
        %681 = vmatprep.subr.mxu0 0.0
        %682 = vmatpush1.msra.mxu0 0.0
        %683 = vmatprep.subr.mxu0 0.0
        %684 = vmatpush1.msra.mxu0 0.0
        %685 = vmatprep.mubr.f32.mxu0 0.0
        %v686 = vand.u32 %v212, 4294901760
        %687 = vmatmul.mubr.f32.gmra.mrb[0].mxu0 %v686
        %v688 = vpop.f32.mrb[0].mxu0
        %v689 = vadd.f32 %v590, %v688
        %v690 = vpop.f32.mrb[0].mxu0
        %691 = vmatprep.mubr.f32.mxu0 0.0
        %v692 = vand.u32 %v215, 4294901760
        %693 = vmatmul.mubr.f32.gmra.mrb[0].mxu0 %v692
        %v694 = vpop.f32.mrb[0].mxu0
        %v695 = vadd.f32 %v598, %v694
        %v696 = vpop.f32.mrb[0].mxu0
        %697 = vmatprep.mubr.f32.mxu0 0.0
        %v698 = vand.u32 %v218, 4294901760
        %699 = vmatmul.mubr.f32.gmra.mrb[0].mxu0 %v698
        %v700 = vpop.f32.mrb[0].mxu0
        %v701 = vadd.f32 %v606, %v700
        %v702 = vpop.f32.mrb[0].mxu0
        %703 = vdwg.mxu0
        %704 = vmatprep.subr.mxu0 0.0
        %v705 = vand.u32 %v199, 4294901760
        %706 = vmatpush1.msra.mxu0 %v705
        %707 = vmatprep.subr.mxu0 0.0
        %v708 = vand.u32 %v200, 4294901760
        %709 = vmatpush1.msra.mxu0 %v708
        %710 = vmatprep.subr.mxu0 0.0
        %v711 = vand.u32 %v201, 4294901760
        %712 = vmatpush1.msra.mxu0 %v711
        %713 = vmatprep.subr.mxu0 0.0
        %v714 = vand.u32 %v202, 4294901760
        %715 = vmatpush1.msra.mxu0 %v714
        %716 = vmatprep.subr.mxu0 0.0
        %717 = vmatpush1.msra.mxu0 0.0
        %718 = vmatprep.subr.mxu0 0.0
        %719 = vmatpush1.msra.mxu0 0.0
        %720 = vmatprep.subr.mxu0 0.0
        %721 = vmatpush1.msra.mxu0 0.0
        %722 = vmatprep.subr.mxu0 0.0
        %723 = vmatpush1.msra.mxu0 0.0
        %724 = vmatprep.subr.mxu0 0.0
        %725 = vmatpush1.msra.mxu0 0.0
        %726 = vmatprep.subr.mxu0 0.0
        %727 = vmatpush1.msra.mxu0 0.0
        %728 = vmatprep.subr.mxu0 0.0
        %729 = vmatpush1.msra.mxu0 0.0
        %730 = vmatprep.subr.mxu0 0.0
        %731 = vmatpush1.msra.mxu0 0.0
        %732 = vmatprep.subr.mxu0 0.0
        %733 = vmatpush1.msra.mxu0 0.0
        %734 = vmatprep.subr.mxu0 0.0
        %735 = vmatpush1.msra.mxu0 0.0
        %736 = vmatprep.subr.mxu0 0.0
        %737 = vmatpush1.msra.mxu0 0.0
        %738 = vmatprep.subr.mxu0 0.0
        %739 = vmatpush1.msra.mxu0 0.0
        %740 = vmatprep.subr.mxu0 0.0
        %741 = vmatpush1.msra.mxu0 0.0
        %742 = vmatprep.subr.mxu0 0.0
        %743 = vmatpush1.msra.mxu0 0.0
        %744 = vmatprep.subr.mxu0 0.0
        %745 = vmatpush1.msra.mxu0 0.0
        %746 = vmatprep.subr.mxu0 0.0
        %747 = vmatpush1.msra.mxu0 0.0
        %748 = vmatprep.subr.mxu0 0.0
        %749 = vmatpush1.msra.mxu0 0.0
        %750 = vmatprep.subr.mxu0 0.0
        %751 = vmatpush1.msra.mxu0 0.0
        %752 = vmatprep.subr.mxu0 0.0
        %753 = vmatpush1.msra.mxu0 0.0
        %754 = vmatprep.subr.mxu0 0.0
        %755 = vmatpush1.msra.mxu0 0.0
        %756 = vmatprep.subr.mxu0 0.0
        %757 = vmatpush1.msra.mxu0 0.0
        %758 = vmatprep.subr.mxu0 0.0
        %759 = vmatpush1.msra.mxu0 0.0
        %760 = vmatprep.subr.mxu0 0.0
        %761 = vmatpush1.msra.mxu0 0.0
        %762 = vmatprep.subr.mxu0 0.0
        %763 = vmatpush1.msra.mxu0 0.0
        %764 = vmatprep.subr.mxu0 0.0
        %765 = vmatpush1.msra.mxu0 0.0
        %766 = vmatprep.subr.mxu0 0.0
        %767 = vmatpush1.msra.mxu0 0.0
        %768 = vmatprep.subr.mxu0 0.0
        %769 = vmatpush1.msra.mxu0 0.0
        %770 = vmatprep.subr.mxu0 0.0
        %771 = vmatpush1.msra.mxu0 0.0
        %772 = vmatprep.mubr.f32.mxu0 0.0
        %v773 = vand.u32 %v212, 4294901760
        %774 = vmatmul.mubr.f32.gmra.mrb[0].mxu0 %v773
        %v775 = vpop.f32.mrb[0].mxu0
        %v776 = vadd.f32 %v689, %v775
        %v777 = vpop.f32.mrb[0].mxu0
        %778 = vmatprep.mubr.f32.mxu0 0.0
        %v779 = vand.u32 %v215, 4294901760
        %780 = vmatmul.mubr.f32.gmra.mrb[0].mxu0 %v779
        %v781 = vpop.f32.mrb[0].mxu0
        %v782 = vadd.f32 %v695, %v781
        %v783 = vpop.f32.mrb[0].mxu0
        %784 = vmatprep.mubr.f32.mxu0 0.0
        %v785 = vand.u32 %v218, 4294901760
        %786 = vmatmul.mubr.f32.gmra.mrb[0].mxu0 %v785
        %v787 = vpop.f32.mrb[0].mxu0
        %v788 = vadd.f32 %v701, %v787
        %v789 = vpop.f32.mrb[0].mxu0
        %790 = vdwg.mxu0
        %v791 = vmul.f32 %v776, 0.5
        %v792 = vmul.f32 %v782, 0.5
        %v793 = vmul.f32 %v788, 0.5
        %v794 = vmul.f32 %v776, 0.70710677
        %v795 = vmul.f32 %v782, 0.70710677
        %v796 = vmul.f32 %v788, 0.70710677
        %v797 = verf.f32.pop %v794
        %v798 = verf.f32.pop %v795
        %v799 = verf.f32.pop %v796
        %v800 = vadd.f32 %v797, 1.0
        %v801 = vadd.f32 %v798, 1.0
        %v802 = vadd.f32 %v799, 1.0
        %v803 = vmul.f32 %v791, %v800
        %v804 = vmul.f32 %v792, %v801
        %v805 = vmul.f32 %v793, %v802
        %806 = vst [vmem:[%s176] sm:$0xff] %v803
        %807 = vst [vmem:[%s176 + $0x8] sm:$0xff] %v804
        %808 = vst [vmem:[%s176 + $0x10] sm:$0xff] %v805
        %s809 = sand.u32 %s93, 1
        %s810 = scalar_lea.sflag [#allocation3], %s809
        %s811 = sand.u32 %s93, 1
        %s812 = smul.addr %s811, 24
        %s813 = scalar_lea.vmem [#allocation2], %s812
        // Predicated region
        $region33: #{message_receiver.1} parent=31 // pred_check
          %p814 = pneg %p103
        $region34: #{message_receiver.1} parent=31 // pred_check_branch
          %816 = sbr.rel (%p814) target = $region36
        $region35: #{message_receiver.1} parent=31 // pred_region
          %s817 = smul.u32 3, %s17
          %s818 = ssub.s32 5, %s817
          %p819 = scmp.lt.s32.totalorder %s818, 3
          %s820 = scalar_select %p819, %s818, 3
          %s821 = smul.u32 128, %s820
          %s823 = ssub.s32 384, %s821
          %824 = vsyncadd %s810, %s823
          %p825 = scmp.ne.s32.totalorder 0, %s821
          %s826 = smul.addr %s817, 128
          %s827 = scalar_lea.hbm %s3, %s826
          %s828 = smul.u32 8, %s820
          %s829 = sshll.u32 %s813, 4
          %s830 = int_to_ptr.vmem [resolvable:$true] %s829
          %s831 = sshll.u32 %s828, 4
          %835 = dma.vmem_to_hbm [thread:$0]  (%p825), %s830, %s831, %s827, %s810, 128, 128, 8
        $region36: #{message_receiver.1} parent=31 // pred_fallthru
          _
      $region32: #{message_receiver.1} parent=5 // pred_fallthru
        _
      %p836 = scmp.le.s32.totalorder 2, %s12
      // Predicated region
      $region37: #{message_receiver.1} parent=5 // pred_check
        %p837 = pneg %p836
      $region38: #{message_receiver.1} parent=5 // pred_check_branch
        %839 = sbr.rel (%p837) target = $region40
      $region39: #{message_receiver.1} parent=5 // pred_region
        %s840 = ssub.s32 %s12, 2
        // Predicated region
        $region41: #{message_receiver.1} parent=39 // pred_check
          %p841 = pneg %p109
        $region42: #{message_receiver.1} parent=39 // pred_check_branch
          %843 = sbr.rel (%p841) target = $region44
        $region43: #{message_receiver.1} parent=39 // pred_region
          %s844 = sand.u32 %s94, 1
          %s845 = scalar_lea.sflag [#allocation3], %s844
          %s846 = sand.u32 %s94, 1
          %s847 = smul.addr %s846, 24
          %s848 = scalar_lea.vmem [#allocation2], %s847
          %849 = dma.done %s845, 384
        $region44: #{message_receiver.1} parent=39 // pred_fallthru
          _
      $region40: #{message_receiver.1} parent=5 // pred_fallthru
        _
    $region6: #{message_receiver.1} parent=1 // loop_footer
      %s16 = sadd.s32 1, %s12
    $region7: #{message_receiver.1} parent=1 // loop_footer_branch
      %11 = sbr.rel target = $region3
    $region8: #{message_receiver.1} parent=1 // loop_exit
      _
    %850 = vsyncpa [#allocation3], 1
    %s851 = scalar_lea.sflag [#allocation3], 1
    %852 = vsyncpa %s851, 1

</llo_original>
